<compile_context>
chip_gen: v5e
topology: v5e:2x2
jax: 0.10.0
libtpu: 0.0.40
codegen_flags: <defaults>
</compile_context>

<pallas_src>
import jax
import jax.numpy as jnp
from jax import lax
from jax.experimental import pallas as pl
from jax.experimental.pallas import tpu as pltpu

BN_EPS = 1e-5


# ----------------------------------------------------------------------------
# Farthest point sampling kernel: xyz (B, N, 3) -> new_xyz (B, npoint, 3)
# ----------------------------------------------------------------------------
def _make_fps_kernel(n, npoint):
    def kernel(xyz_ref, out_ref):
        xyz = xyz_ref[...].astype(jnp.float32)                  # (n, 3)
        row = lax.broadcasted_iota(jnp.int32, (n, 1), 0)

        def step(i, carry):
            cur, mind = carry                                    # (1,3), (n,1)
            out_ref[pl.ds(i, 1), :] = cur.astype(out_ref.dtype)
            d = xyz - cur
            d2 = jnp.sum(d * d, axis=-1, keepdims=True)          # (n, 1)
            mind = jnp.minimum(mind, d2)
            mx = jnp.max(mind, axis=0, keepdims=True)            # (1, 1)
            idx = jnp.min(jnp.where(mind == mx, row, n),
                          axis=0, keepdims=True)                 # (1, 1) int32
            nxt = jnp.sum(jnp.where(row == idx, xyz, 0.0),
                          axis=0, keepdims=True)                 # (1, 3)
            return nxt, mind

        cur0 = xyz[0:1, :]                                       # start index 0
        mind0 = jnp.full((n, 1), 1e10, jnp.float32)
        lax.fori_loop(0, npoint, step, (cur0, mind0))

    return kernel


def farthest_point_sample_pallas(xyz, npoint):
    B, N, _ = xyz.shape
    return pl.pallas_call(
        _make_fps_kernel(N, npoint),
        out_shape=jax.ShapeDtypeStruct((B, npoint, 3), jnp.float32),
        grid=(B,),
        in_specs=[pl.BlockSpec((pl.Squeezed(), N, 3), lambda b: (b, 0, 0))],
        out_specs=pl.BlockSpec((pl.Squeezed(), npoint, 3), lambda b: (b, 0, 0)),
        compiler_params=pltpu.CompilerParams(dimension_semantics=("parallel",)),
    )(xyz)


# ----------------------------------------------------------------------------
# Grouping + SharedMLP + max-pool kernel (one grouper / one MLP stack)
# ----------------------------------------------------------------------------
def _make_sa_kernel(TP, TS, n_layers, radius, nsample):
    r2 = float(radius) * float(radius)
    ns = float(nsample)

    def kernel(newxyz_ref, xyz_ref, feat_ref, *refs):
        out_ref, max_acc, cnt_acc = refs[-3], refs[-2], refs[-1]
        params = refs[:-3]

        si = pl.program_id(2)

        @pl.when(si == 0)
        def _init():
            max_acc[...] = jnp.zeros_like(max_acc)   # outputs are ReLU'd (>=0)
            cnt_acc[...] = jnp.zeros_like(cnt_acc)

        xs = xyz_ref[...].astype(jnp.float32)        # (TS, 3) source coords
        fs = feat_ref[...].astype(jnp.float32)       # (TS, C) source features

        w0x = params[0][...]                         # (3, C0)   BN-folded
        w0f = params[1][...]                         # (C, C0)
        s0 = params[2][...]                          # (1, C0)
        hidden = [(params[3 + 2 * i][...], params[4 + 2 * i][...])
                  for i in range(n_layers - 1)]

        # per-source part of layer 0 (shared across all query points)
        a_src = (jnp.dot(xs, w0x, preferred_element_type=jnp.float32)
                 + jnp.dot(fs, w0f, preferred_element_type=jnp.float32))  # (TS,C0)

        # strictly-lower triangular ones: prefix[j] = sum_{k<j} x[k]
        rr = lax.broadcasted_iota(jnp.int32, (TS, TS), 0)
        cc = lax.broadcasted_iota(jnp.int32, (TS, TS), 1)
        lower = (cc < rr).astype(jnp.float32)        # (TS, TS)

        def per_query(p, carry):
            xq_p = newxyz_ref[pl.ds(p, 1), :].astype(jnp.float32)   # (1, 3)
            diff = xs - xq_p                                        # (TS, 3)
            d2 = jnp.sum(diff * diff, axis=-1, keepdims=True)       # (TS, 1)
            in_ball = (d2 <= r2)
            ibf = in_ball.astype(jnp.float32)
            prefix = jnp.dot(lower, ibf,
                             preferred_element_type=jnp.float32)    # (TS, 1)
            cnt_p = cnt_acc[pl.ds(p, 1), :]                         # (1, 1)
            rank = prefix + cnt_p                                   # (TS, 1)
            # ball-query keeps the first `nsample` in-radius points (by index);
            # repeats used as padding never change the max-pool result.
            sel = jnp.logical_and(in_ball, rank < ns)               # (TS, 1)

            bq_p = jnp.dot(xq_p, w0x,
                           preferred_element_type=jnp.float32)      # (1, C0)
            h = jnp.maximum(a_src - bq_p + s0, 0.0)                 # (TS, C0)
            for (w, s) in hidden:
                h = jnp.maximum(
                    jnp.dot(h, w, preferred_element_type=jnp.float32) + s, 0.0)
            h = jnp.where(sel, h, 0.0)                              # mask group
            v = jnp.max(h, axis=0, keepdims=True)                   # (1, C_last)

            max_acc[pl.ds(p, 1), :] = jnp.maximum(max_acc[pl.ds(p, 1), :], v)
            cnt_acc[pl.ds(p, 1), :] = cnt_p + jnp.sum(ibf, axis=0,
                                                      keepdims=True)
            return carry

        lax.fori_loop(0, TP, per_query, 0)

        @pl.when(si == pl.num_programs(2) - 1)
        def _store():
            out_ref[...] = max_acc[...].astype(out_ref.dtype)

    return kernel


# ----------------------------------------------------------------------------
# Host-side parameter folding: Conv2d(1x1) + BN(running stats) -> W', shift
# ----------------------------------------------------------------------------
def _fold_mlp(layer_params, c_feat):
    flat, dims = [], [3 + c_feat]
    for li, (W, b, gamma, beta, rmean, rvar) in enumerate(layer_params):
        scale = gamma / jnp.sqrt(rvar + BN_EPS)
        Wf = (W * scale[:, None]).astype(jnp.float32)        # (Cout, Cin)
        shift = ((b - rmean) * scale + beta).reshape(1, -1).astype(jnp.float32)
        if li == 0:
            flat += [Wf[:, :3].T, Wf[:, 3:].T, shift]        # split xyz / feat
        else:
            flat += [Wf.T, shift]
        dims.append(W.shape[0])
    return flat, dims


# ----------------------------------------------------------------------------
# Module wrapper: _PointnetSAModuleBase.forward
#   xyz (B,N,3), features (B,N,C)  ->  (new_xyz (B,npoint,3),
#                                       new_features (B, sum_k mlp_k[-1], npoint))
# groupers: list of (radius, nsample, layer_params) with
#   layer_params = [(W, b, gamma, beta, running_mean, running_var), ...]
# ----------------------------------------------------------------------------
def pointnet_sa_module(xyz, features, groupers, npoint=None, new_xyz=None,
                       tile_src=None, tile_q=None):
    B, N, _ = xyz.shape
    C = features.shape[-1]

    if new_xyz is None:
        if npoint is None:
            raise NotImplementedError("GroupAll path not implemented")
        new_xyz = farthest_point_sample_pallas(xyz, npoint)
    P = new_xyz.shape[1]

    # source tiling (+ far-away sentinel padding: never inside any ball)
    TS = tile_src if tile_src is not None else min(512, ((N + 7) // 8) * 8)
    assert TS % 8 == 0
    Np = pl.cdiv(N, TS) * TS
    if Np != N:
        pad = Np - N
        xyz_p = jnp.concatenate([xyz, jnp.full((B, pad, 3), 1e6, xyz.dtype)], 1)
        feat_p = jnp.concatenate(
            [features, jnp.zeros((B, pad, C), features.dtype)], 1)
    else:
        xyz_p, feat_p = xyz, features

    TP = tile_q if tile_q is not None else P
    assert P % TP == 0 and (TP == P or TP % 8 == 0)

    outs = []
    for (radius, nsample, layer_params) in groupers:
        flat, dims = _fold_mlp(layer_params, C)
        c_last, n_layers = dims[-1], len(dims) - 1
        in_specs = [
            pl.BlockSpec((pl.Squeezed(), TP, 3), lambda b, q, s: (b, q, 0)),
            pl.BlockSpec((pl.Squeezed(), TS, 3), lambda b, q, s: (b, s, 0)),
            pl.BlockSpec((pl.Squeezed(), TS, C), lambda b, q, s: (b, s, 0)),
        ] + [pl.BlockSpec(p.shape, lambda b, q, s: (0, 0)) for p in flat]

        out = pl.pallas_call(
            _make_sa_kernel(TP, TS, n_layers, radius, nsample),
            out_shape=jax.ShapeDtypeStruct((B, P, c_last), jnp.float32),
            grid_spec=pltpu.PrefetchScalarGridSpec(
                num_scalar_prefetch=0,
                grid=(B, P // TP, Np // TS),
                in_specs=in_specs,
                out_specs=pl.BlockSpec((pl.Squeezed(), TP, c_last),
                                       lambda b, q, s: (b, q, 0)),
                scratch_shapes=[pltpu.VMEM((TP, c_last), jnp.float32),
                                pltpu.VMEM((TP, 1), jnp.float32)]),
            compiler_params=pltpu.CompilerParams(
                dimension_semantics=("parallel", "parallel", "arbitrary")),
        )(new_xyz, xyz_p, feat_p, *flat)
        outs.append(out)

    # single cheap layout transpose to match the PyTorch (B, C_total, npoint)
    new_features = jnp.transpose(jnp.concatenate(outs, axis=-1), (0, 2, 1))
    return new_xyz, new_features


# ----------------------------------------------------------------------------
# Pure-JAX replica of the PyTorch forward (for verification)
# ----------------------------------------------------------------------------
def reference_sa_module(xyz, features, groupers, npoint):
    B, N, _ = xyz.shape

    def fps_one(pts):
        def step(i, carry):
            cent, dist, far = carry
            cent = cent.at[i].set(far)
            c = pts[far]
            d = jnp.sum((pts - c) ** 2, axis=-1)
            dist = jnp.minimum(dist, d)
            far = jnp.argmax(dist).astype(jnp.int32)
            return cent, dist, far
        cent0 = jnp.zeros((npoint,), jnp.int32)
        dist0 = jnp.full((N,), 1e10, jnp.float32)
        cent, _, _ = lax.fori_loop(0, npoint, step,
                                   (cent0, dist0, jnp.int32(0)))
        return cent

    idx = jax.vmap(fps_one)(xyz)
    new_xyz = jax.vmap(lambda p, i: p[i])(xyz, idx)          # (B, npoint, 3)

    outs = []
    for (radius, nsample, layer_params) in groupers:
        d2 = jnp.sum((new_xyz[:, :, None, :] - xyz[:, None, :, :]) ** 2, -1)
        arange = jnp.arange(N, dtype=jnp.int32)
        grp = jnp.where(d2 <= radius ** 2, arange[None, None, :], N)
        grp = jnp.sort(grp, axis=-1)[:, :, :nsample]
        first = grp[:, :, :1]
        grp = jnp.where(grp == N, jnp.broadcast_to(first, grp.shape), grp)

        g_xyz = jax.vmap(lambda a, i: a[i])(xyz, grp) - new_xyz[:, :, None, :]
        g_feat = jax.vmap(lambda a, i: a[i])(features, grp)
        h = jnp.concatenate([g_xyz, g_feat], axis=-1)        # (B, P, ns, 3+C)
        for (W, b, gamma, beta, rmean, rvar) in layer_params:
            h = jnp.einsum('bpsc,dc->bpsd', h, W) + b
            h = (h - rmean) / jnp.sqrt(rvar + BN_EPS) * gamma + beta
            h = jnp.maximum(h, 0.0)
        outs.append(jnp.max(h, axis=2))                      # (B, P, C_last)
    new_feats = jnp.transpose(jnp.concatenate(outs, axis=-1), (0, 2, 1))
    return new_xyz, new_feats


if __name__ == "__main__":
    key = jax.random.PRNGKey(0)
    B, N, C = 2, 32, 4
    npoint = 8
    mlp_spec = [16, 32]
    grouper_cfgs = [(0.6, 8), (2.0, 4)]     # (radius, nsample), MSG-style

    ks = jax.random.split(key, 3)
    xyz = jax.random.normal(ks[0], (B, N, 3), jnp.float32)
    features = jax.random.normal(ks[1], (B, N, C), jnp.float32)

    groupers = []
    pkeys = jax.random.split(ks[2], len(grouper_cfgs))
    for gi, (radius, nsample) in enumerate(grouper_cfgs):
        dims = [3 + C] + mlp_spec
        layer_params = []
        lkeys = jax.random.split(pkeys[gi], len(dims) - 1)
        for li in range(len(dims) - 1):
            cin, cout = dims[li], dims[li + 1]
            kw, kb, kg, kbt, km, kv = jax.random.split(lkeys[li], 6)
            W = jax.random.normal(kw, (cout, cin), jnp.float32) * 0.2
            b = jax.random.normal(kb, (cout,), jnp.float32) * 0.1
            gamma = 1.0 + 0.1 * jax.random.normal(kg, (cout,), jnp.float32)
            beta = 0.1 * jax.random.normal(kbt, (cout,), jnp.float32)
            rmean = 0.1 * jax.random.normal(km, (cout,), jnp.float32)
            rvar = jax.random.uniform(kv, (cout,), jnp.float32, 0.5, 1.5)
            layer_params.append((W, b, gamma, beta, rmean, rvar))
        groupers.append((radius, nsample, layer_params))

    new_xyz, new_feats = pointnet_sa_module(xyz, features, groupers,
                                            npoint=npoint, tile_src=16)
    new_xyz = jax.block_until_ready(new_xyz)
    new_feats = jax.block_until_ready(new_feats)

    ref_xyz, ref_feats = reference_sa_module(xyz, features, groupers, npoint)

    c_total = sum(g[2][-1][0].shape[0] for g in groupers)
    assert new_xyz.shape == (B, npoint, 3), new_xyz.shape
    assert new_feats.shape == (B, c_total, npoint), new_feats.shape
    assert jnp.allclose(new_xyz, ref_xyz, atol=1e-5), \
        float(jnp.max(jnp.abs(new_xyz - ref_xyz)))
    assert jnp.allclose(new_feats, ref_feats, atol=2e-4, rtol=2e-4), \
        float(jnp.max(jnp.abs(new_feats - ref_feats)))
    print("KERNEL_OK")
</pallas_src>

<mosaic_0001>
module attributes {stable_mosaic.version = 11 : i64} {
  func.func @kernel(%arg0: i32, %arg1: memref<1x32x3xf32, #tpu.memory_space<vmem>>, %arg2: memref<1x8x3xf32, #tpu.memory_space<vmem>>) attributes {dimension_semantics = [#tpu.dimension_semantics<parallel>], iteration_bounds = array<i64: 2>, scalar_prefetch = 0 : i64, scratch_operands = 0 : i64, tpu.core_type = #tpu.core_type<tc>, window_params = [{transform_indices = @transform_0, window_bounds = array<i64: 1, 32, 3>}, {transform_indices = @transform_1, window_bounds = array<i64: 1, 8, 3>}]} {
    %c0 = arith.constant 0 : index
    %c0_0 = arith.constant 0 : index
    %c0_1 = arith.constant 0 : index
    %0 = vector.load %arg1[%c0, %c0_0, %c0_1] : memref<1x32x3xf32, #tpu.memory_space<vmem>>, vector<1x32x3xf32>
    %1 = vector.shape_cast %0 : vector<1x32x3xf32> to vector<32x3xf32>
    %2 = tpu.iota {dimensions = array<i32: 0>} : vector<32x1xi32>
    %3 = vector.extract_strided_slice %1 {offsets = [0, 0], sizes = [1, 3], strides = [1, 1]} : vector<32x3xf32> to vector<1x3xf32>
    %cst = arith.constant 1.000000e+10 : f32
    %4 = vector.broadcast %cst : f32 to vector<32x1xf32>
    %c0_i32 = arith.constant 0 : i32
    %c8_i32 = arith.constant 8 : i32
    %5 = arith.addi %c0_i32, %c8_i32 : i32
    %c1_i32 = arith.constant 1 : i32
    %6:2 = scf.for %arg3 = %c0_i32 to %5 step %c1_i32 iter_args(%arg4 = %3, %arg5 = %4) -> (vector<1x3xf32>, vector<32x1xf32>)  : i32 {
      %c0_3 = arith.constant 0 : index
      %7 = arith.index_cast %arg3 : i32 to index
      %c0_4 = arith.constant 0 : index
      %8 = vector.load %arg2[%c0_3, %7, %c0_4] : memref<1x8x3xf32, #tpu.memory_space<vmem>>, vector<1x1x3xf32>
      %9 = vector.shape_cast %8 : vector<1x1x3xf32> to vector<1x3xf32>
      %10 = vector.shape_cast %arg4 : vector<1x3xf32> to vector<1x1x3xf32>
      tpu.vector_store %arg2[%c0_3, %7, %c0_4], %10 {strides = array<i32>} : memref<1x8x3xf32, #tpu.memory_space<vmem>>, vector<1x1x3xf32>,
      %11 = vector.broadcast %arg4 : vector<1x3xf32> to vector<32x3xf32>
      %12 = arith.subf %1, %11 : vector<32x3xf32>
      %13 = arith.mulf %12, %12 : vector<32x3xf32>
      %cst_5 = arith.constant dense<0.000000e+00> : vector<32xf32>
      %14 = vector.multi_reduction <add>, %13, %cst_5 [1] : vector<32x3xf32> to vector<32xf32>
      %15 = vector.shape_cast %14 : vector<32xf32> to vector<32x1xf32>
      %16 = arith.minimumf %arg5, %15 : vector<32x1xf32>
      %cst_6 = arith.constant dense<0xFF800000> : vector<1xf32>
      %17 = vector.multi_reduction <maximumf>, %16, %cst_6 [0] : vector<32x1xf32> to vector<1xf32>
      %18 = vector.shape_cast %17 : vector<1xf32> to vector<1x1xf32>
      %19 = vector.broadcast %18 : vector<1x1xf32> to vector<32x1xf32>
      %20 = arith.cmpf oeq, %16, %19 : vector<32x1xf32>
      %c32_i32 = arith.constant 32 : i32
      %21 = vector.broadcast %c32_i32 : i32 to vector<32x1xi32>
      %22 = arith.select %20, %2, %21 : vector<32x1xi1>, vector<32x1xi32>
      %cst_7 = arith.constant dense<2147483647> : vector<1xi32>
      %23 = vector.multi_reduction <minsi>, %22, %cst_7 [0] : vector<32x1xi32> to vector<1xi32>
      %24 = vector.shape_cast %23 : vector<1xi32> to vector<1x1xi32>
      %25 = vector.broadcast %24 : vector<1x1xi32> to vector<32x1xi32>
      %26 = arith.cmpi eq, %2, %25 : vector<32x1xi32>
      %cst_8 = arith.constant 0.000000e+00 : f32
      %27 = vector.shape_cast %26 : vector<32x1xi1> to vector<32x1xi1>
      %28 = vector.broadcast %27 : vector<32x1xi1> to vector<32x3xi1>
      %29 = vector.broadcast %cst_8 : f32 to vector<32x3xf32>
      %30 = arith.select %28, %1, %29 : vector<32x3xi1>, vector<32x3xf32>
      %cst_9 = arith.constant dense<0.000000e+00> : vector<3xf32>
      %31 = vector.multi_reduction <add>, %30, %cst_9 [0] : vector<32x3xf32> to vector<3xf32>
      %32 = vector.shape_cast %31 : vector<3xf32> to vector<1x3xf32>
      scf.yield %32, %16 : vector<1x3xf32>, vector<32x1xf32>
    }
    %c8_i32_2 = arith.constant 8 : i32
    return
  }
  func.func @transform_0(%arg0: i32) -> (i32, i32, i32) {
    %c0_i32 = arith.constant 0 : i32
    %c0_i32_0 = arith.constant 0 : i32
    %c0_i32_1 = arith.constant 0 : i32
    return %arg0, %c0_i32, %c0_i32_0 : i32, i32, i32
  }
  func.func @transform_1(%arg0: i32) -> (i32, i32, i32) {
    %c0_i32 = arith.constant 0 : i32
    %c0_i32_0 = arith.constant 0 : i32
    %c0_i32_1 = arith.constant 0 : i32
    return %arg0, %c0_i32, %c0_i32_0 : i32, i32, i32
  }
}

</mosaic_0001>

<llo_original>
// kernel: tpu_custom_call.1
$region0: #{tpu_custom_call.1}
  #allocation0 [shape = 'u32[]', space=smem, size = 0x4, offset = 0x4, fixed_abs, tag = 'smem constant byte address 0x4 - core index']
  #allocation1 [shape = 'u32[72,128]{1,0:T(1,128)}', space=vmem, size = 0x9000, scoped, tag = 'internal scratch']
  %s0 = inlined_call_operand.vmem [shape: f32[2,32,3], index: 0, kind: input, shape index: {}]
  %s1 = inlined_call_operand.vmem [shape: f32[2,8,3], index: 1, kind: output, shape index: {}]
  %s2 = sld [smem:[#allocation0]]
  $region44: #{tpu_custom_call.1} parent=0
    _
  %s4 = ssub.s32 1, %s2
  %s5 = scalar_select 0, %s4, %s2
  loop: start=0, step=1, limit=4
  $region2: #{tpu_custom_call.1} parent=0 // loop_pre_header
    _
  $region3: #{tpu_custom_call.1} parent=0 // loop_header
    %s7 = sphi 0, %s11
    %p8 = scmp.ge.s32.totalorder %s7, 4
    %s17 = sphi 0, %s19
    %s20 = sphi 0, %s17
    %s21 = sphi 0, %s20
    %s37 = sphi 0, %s21
    %s43 = sphi 0, %s45
    %s46 = sphi 0, %s43
    %s47 = sphi 0, %s46
    %s63 = sphi 0, %s47
  $region4: #{tpu_custom_call.1} parent=0 // loop_header_branch
    %10 = sbr.rel (%p8) target = $region8
  $region5: #{tpu_custom_call.1} parent=0 // loop_body
    %s12 = ssub.s32 %s7, 1
    %s13 = ssub.s32 %s7, 2
    %s14 = sadd.s32 %s7, 1
    %s15 = ssub.s32 %s7, %s14
    %p16 = scmp.eq.s32.totalorder %s15, 0
    %s18 = sadd.s32 %s17, 1
    %s19 = scalar_select %p16, %s17, %s18
    %p22 = pneg %p16
    %p23 = scmp.eq.s32.totalorder %s7, 1
    %p24 = por %p22, %p23
    %p25 = scmp.ne.s32.totalorder %s17, %s20
    %p26 = scmp.eq.s32.totalorder %s7, 0
    %p27 = por %p25, %p26
    %p28 = scmp.ne.s32.totalorder %s17, %s20
    %p29 = scmp.eq.s32.totalorder %s12, 1
    %p30 = por %p28, %p29
    %p31 = scmp.ne.s32.totalorder %s20, %s21
    %p32 = scmp.eq.s32.totalorder %s12, 0
    %p33 = por %p31, %p32
    %p34 = scmp.ne.s32.totalorder %s20, %s21
    %p35 = scmp.eq.s32.totalorder %s13, 1
    %p36 = por %p34, %p35
    %p38 = scmp.ne.s32.totalorder %s21, %s37
    %p39 = scmp.eq.s32.totalorder %s13, 0
    %p40 = por %p38, %p39
    %s41 = ssub.s32 %s7, %s14
    %p42 = scmp.eq.s32.totalorder %s41, 0
    %s44 = sadd.s32 %s43, 1
    %s45 = scalar_select %p42, %s43, %s44
    %p48 = pneg %p42
    %p49 = scmp.eq.s32.totalorder %s7, 1
    %p50 = por %p48, %p49
    %p51 = scmp.ne.s32.totalorder %s43, %s46
    %p52 = scmp.eq.s32.totalorder %s7, 0
    %p53 = por %p51, %p52
    %p54 = scmp.ne.s32.totalorder %s43, %s46
    %p55 = scmp.eq.s32.totalorder %s12, 1
    %p56 = por %p54, %p55
    %p57 = scmp.ne.s32.totalorder %s46, %s47
    %p58 = scmp.eq.s32.totalorder %s12, 0
    %p59 = por %p57, %p58
    %p60 = scmp.ne.s32.totalorder %s46, %s47
    %p61 = scmp.eq.s32.totalorder %s13, 1
    %p62 = por %p60, %p61
    %p64 = scmp.ne.s32.totalorder %s47, %s63
    %p65 = scmp.eq.s32.totalorder %s13, 0
    %p66 = por %p64, %p65
    %p67 = scmp.le.s32.totalorder 1, %s7
    %p68 = scmp.lt.s32.totalorder %s7, 3
    %p69 = pnand %p67, %p68
    %p70 = pneg %p69
    // Predicated region
    $region9: #{tpu_custom_call.1} parent=5 // pred_check
      _
    $region10: #{tpu_custom_call.1} parent=5 // pred_check_branch
      %72 = sbr.rel (%p69) target = $region12
    $region11: #{tpu_custom_call.1} parent=5 // pred_region
      %s73 = ssub.s32 %s7, 1
    $region12: #{tpu_custom_call.1} parent=5 // pred_fallthru
      _
    %p74 = scmp.lt.s32.totalorder %s7, 2
    // Predicated region
    $region13: #{tpu_custom_call.1} parent=5 // pred_check
      %p75 = pneg %p74
    $region14: #{tpu_custom_call.1} parent=5 // pred_check_branch
      %77 = sbr.rel (%p75) target = $region16
    $region15: #{tpu_custom_call.1} parent=5 // pred_region
      // Predicated region
      $region17: #{tpu_custom_call.1} parent=15 // pred_check
        %p78 = pneg %p27
      $region18: #{tpu_custom_call.1} parent=15 // pred_check_branch
        %80 = sbr.rel (%p78) target = $region20
      $region19: #{tpu_custom_call.1} parent=15 // pred_region
        %p81 = scmp.lt.s32.totalorder %s7, 1
        %s82 = scalar_select %p81, %s7, 1
        %s83 = smul.addr %s82, 4
        %s84 = smul.addr %s83, 8
        %s85 = scalar_lea.vmem %s0, %s84
      $region20: #{tpu_custom_call.1} parent=15 // pred_fallthru
        _
    $region16: #{tpu_custom_call.1} parent=5 // pred_fallthru
      _
    %p86 = scmp.le.s32.totalorder 1, %s7
    %p87 = scmp.lt.s32.totalorder %s7, 3
    %p88 = pnand %p86, %p87
    %p89 = pneg %p88
    // Predicated region
    $region21: #{tpu_custom_call.1} parent=5 // pred_check
      _
    $region22: #{tpu_custom_call.1} parent=5 // pred_check_branch
      %91 = sbr.rel (%p88) target = $region24
    $region23: #{tpu_custom_call.1} parent=5 // pred_region
      %s92 = ssub.s32 %s7, 1
      %p93 = scmp.lt.s32.totalorder %s12, 1
      %s94 = scalar_select %p93, %s12, 1
      %s95 = smul.addr %s94, 4
      %s96 = smul.addr %s95, 8
      %s97 = scalar_lea.vmem %s0, %s96
      %p98 = pneg %p33
      %p99 = pneg %p30
      %p100 = pneg %p59
      %p101 = pneg %p56
      %p102 = scmp.lt.s32.totalorder %s12, 1
      %s103 = scalar_select %p102, %s12, 1
      %s104 = smul.addr %s103, 8
      %s105 = scalar_lea.vmem %s1, %s104
      %p106 = scmp.lt.s32.totalorder %s12, 1
      %s107 = scalar_select %p106, %s12, 1
      %s108 = smul.addr %s107, 4
      %s109 = smul.addr %s108, 8
      %s110 = scalar_lea.vmem %s0, %s109
      %p111 = scmp.lt.s32.totalorder %s12, 1
      %s112 = scalar_select %p111, %s12, 1
      %s113 = smul.addr %s112, 8
      %s114 = scalar_lea.vmem %s1, %s113
      %v115 = vld [vmem:[%s110] sm:$0xff]
      %v116 = vld [vmem:[%s110 + $0x8] sm:$0xff]
      %v117 = vld [vmem:[%s110 + $0x10] sm:$0xff]
      %v118 = vld [vmem:[%s110 + $0x18] sm:$0xff]
      %v119 = vlaneseq
      %v120 = vshrl.u32 %v119, 7
      %v121 = vadd.s32 %v120, 8
      %v122 = vadd.s32 %v120, 16
      %v123 = vadd.s32 %v120, 24
      loop: start=0, step=1, limit=8
      $region25: #{tpu_custom_call.1} parent=23 // loop_pre_header
        _
      $region26: #{tpu_custom_call.1} parent=23 // loop_header
        %s125 = sphi 0, %s129
        %p126 = scmp.ge.s32.totalorder %s125, 8
        %v130 = vphi %v115, %v224
        %v131 = vphi 1e+10, %v160
        %v132 = vphi 1e+10, %v161
        %v133 = vphi 1e+10, %v162
        %v134 = vphi 1e+10, %v163
      $region27: #{tpu_custom_call.1} parent=23 // loop_header_branch
        %128 = sbr.rel (%p126) target = $region31
      $region28: #{tpu_custom_call.1} parent=23 // loop_body
        %s135 = scalar_lea.vmem %s114, %s125
        %vm136 = vcmask 16384
        %137 = vst.msk [vmem:[%s135] sm:$0x1] %vm136, %v130
        %v138 = vperm.slane %v130, 0
        %v139 = vsub.f32 %v115, %v138
        %v140 = vsub.f32 %v116, %v138
        %v141 = vsub.f32 %v117, %v138
        %v142 = vsub.f32 %v118, %v138
        %v143 = vmul.f32 %v139, %v139
        %v144 = vmul.f32 %v140, %v140
        %v145 = vmul.f32 %v141, %v141
        %v146 = vmul.f32 %v142, %v142
        %vm147 = vcmask 23552
        %v148 = vsel %vm147, %v143, 0.0
        %149 = vadd.xlane.f32.xlu0 %v148
        %v150 = vpop.xlane.xlu0 %149
        %v151 = vsel %vm147, %v144, 0.0
        %152 = vadd.xlane.f32.xlu0 %v151
        %v153 = vpop.xlane.xlu0 %152
        %v154 = vsel %vm147, %v145, 0.0
        %155 = vadd.xlane.f32.xlu0 %v154
        %v156 = vpop.xlane.xlu0 %155
        %v157 = vsel %vm147, %v146, 0.0
        %158 = vadd.xlane.f32.xlu0 %v157
        %v159 = vpop.xlane.xlu0 %158
        %v160 = vmin.f32 %v131, %v150
        %v161 = vmin.f32 %v132, %v153
        %v162 = vmin.f32 %v133, %v156
        %v163 = vmin.f32 %v134, %v159
        %v164 = vmax.f32 %v160, %v161
        %v165 = vmax.f32 %v162, %v163
        %v166 = vmax.f32 %v164, %v165
        %v167 = vrot.slane %v166, 4
        %v168 = vmax.f32 %v166, %v167
        %v169 = vrot.slane %v168, 2
        %v170 = vmax.f32 %v168, %v169
        %v171 = vrot.slane %v170, 1
        %v172 = vmax.f32 %v170, %v171
        %vm173 = vcmp.eq.f32.partialorder %v160, %v172
        %vm174 = vcmp.eq.f32.partialorder %v161, %v172
        %vm175 = vcmp.eq.f32.partialorder %v162, %v172
        %vm176 = vcmp.eq.f32.partialorder %v163, %v172
        %v177 = vsel %vm173, %v120, 32
        %v178 = vsel %vm174, %v121, 32
        %v179 = vsel %vm175, %v122, 32
        %v180 = vsel %vm176, %v123, 32
        %vm181 = vcmp.lt.s32.totalorder %v177, %v178
        %v182 = vsel %vm181, %v177, %v178
        %vm183 = vcmp.lt.s32.totalorder %v179, %v180
        %v184 = vsel %vm183, %v179, %v180
        %vm185 = vcmp.lt.s32.totalorder %v182, %v184
        %v186 = vsel %vm185, %v182, %v184
        %v187 = vrot.slane %v186, 4
        %vm188 = vcmp.lt.s32.totalorder %v186, %v187
        %v189 = vsel %vm188, %v186, %v187
        %v190 = vrot.slane %v189, 2
        %vm191 = vcmp.lt.s32.totalorder %v189, %v190
        %v192 = vsel %vm191, %v189, %v190
        %v193 = vrot.slane %v192, 1
        %vm194 = vcmp.lt.s32.totalorder %v192, %v193
        %v195 = vsel %vm194, %v192, %v193
        %vm196 = vcmp.eq.s32.totalorder %v120, %v195
        %vm197 = vcmp.eq.s32.totalorder %v121, %v195
        %vm198 = vcmp.eq.s32.totalorder %v122, %v195
        %vm199 = vcmp.eq.s32.totalorder %v123, %v195
        %v200 = vsel %vm196, 1, 0
        %v201 = vsel %vm197, 1, 0
        %v202 = vsel %vm198, 1, 0
        %v203 = vsel %vm199, 1, 0
        %vm204 = vcmp.eq.s32.totalorder %v200, 1
        %vm205 = vcmp.eq.s32.totalorder %v201, 1
        %vm206 = vcmp.eq.s32.totalorder %v202, 1
        %vm207 = vcmp.eq.s32.totalorder %v203, 1
        %v208 = vsel %vm204, %v115, 0.0
        %v209 = vsel %vm205, %v116, 0.0
        %v210 = vsel %vm206, %v117, 0.0
        %v211 = vsel %vm207, %v118, 0.0
        %v212 = vsel %vm147, %v208, 0.0
        %v213 = vsel %vm147, %v209, 0.0
        %v214 = vadd.f32 %v212, %v213
        %v215 = vsel %vm147, %v210, 0.0
        %v216 = vadd.f32 %v214, %v215
        %v217 = vsel %vm147, %v211, 0.0
        %v218 = vadd.f32 %v216, %v217
        %v219 = vrot.slane %v218, 4
        %v220 = vadd.f32 %v218, %v219
        %v221 = vrot.slane %v220, 2
        %v222 = vadd.f32 %v220, %v221
        %v223 = vrot.slane %v222, 1
        %v224 = vadd.f32 %v222, %v223
      $region29: #{tpu_custom_call.1} parent=23 // loop_footer
        %s129 = sadd.s32 1, %s125
      $region30: #{tpu_custom_call.1} parent=23 // loop_footer_branch
        %124 = sbr.rel target = $region26
      $region31: #{tpu_custom_call.1} parent=23 // loop_exit
        _
      %p225 = scmp.lt.s32.totalorder %s12, 1
      %s226 = scalar_select %p225, %s12, 1
      %s227 = smul.addr %s226, 8
      %s228 = scalar_lea.vmem %s1, %s227
      // Predicated region
      $region32: #{tpu_custom_call.1} parent=23 // pred_check
        %p229 = pneg %p56
      $region33: #{tpu_custom_call.1} parent=23 // pred_check_branch
        %231 = sbr.rel (%p229) target = $region35
      $region34: #{tpu_custom_call.1} parent=23 // pred_region
        _
      $region35: #{tpu_custom_call.1} parent=23 // pred_fallthru
        _
    $region24: #{tpu_custom_call.1} parent=5 // pred_fallthru
      _
    %p232 = scmp.le.s32.totalorder 2, %s7
    // Predicated region
    $region36: #{tpu_custom_call.1} parent=5 // pred_check
      %p233 = pneg %p232
    $region37: #{tpu_custom_call.1} parent=5 // pred_check_branch
      %235 = sbr.rel (%p233) target = $region39
    $region38: #{tpu_custom_call.1} parent=5 // pred_region
      %s236 = ssub.s32 %s7, 2
      // Predicated region
      $region40: #{tpu_custom_call.1} parent=38 // pred_check
        %p237 = pneg %p62
      $region41: #{tpu_custom_call.1} parent=38 // pred_check_branch
        %239 = sbr.rel (%p237) target = $region43
      $region42: #{tpu_custom_call.1} parent=38 // pred_region
        %p240 = scmp.lt.s32.totalorder %s13, 1
        %s241 = scalar_select %p240, %s13, 1
        %s242 = smul.addr %s241, 8
        %s243 = scalar_lea.vmem %s1, %s242
      $region43: #{tpu_custom_call.1} parent=38 // pred_fallthru
        _
    $region39: #{tpu_custom_call.1} parent=5 // pred_fallthru
      _
  $region6: #{tpu_custom_call.1} parent=0 // loop_footer
    %s11 = sadd.s32 1, %s7
  $region7: #{tpu_custom_call.1} parent=0 // loop_footer_branch
    %6 = sbr.rel target = $region3
  $region8: #{tpu_custom_call.1} parent=0 // loop_exit
    _

</llo_original>
